<compile_context>
chip_gen: v7x
topology: tpu7x:2x2x1
jax: 0.10.0
libtpu: 0.0.40
codegen_flags: <defaults>
</compile_context>

<pallas_src>
import functools

import jax
import jax.numpy as jnp
import numpy as np
from jax.experimental import pallas as pl
from jax.experimental.pallas import tpu as pltpu


_LANE = 128
_TARGET_BLOCK_BYTES = 4 * 1024 * 1024        # ~4 MiB blocks: per-step overhead <10%
_MIN_BLOCK_BYTES = 1 * 1024 * 1024           # never shrink below this for megacore splits
_S_TILE_TARGET_BYTES = 2 * 1024 * 1024       # per-S-tile input bytes in the tiled path
_SINGLE_PASS_VMEM_BUDGET = 40 * 1024 * 1024  # fused-path footprint cap (fits v7x 64 MiB)
_VMEM_LIMIT_BYTES = 48 * 1024 * 1024         # explicit scoped-VMEM limit (all generations)


# ---------------------------------------------------------------------------
# Shared in-kernel helper
# ---------------------------------------------------------------------------
def _attend_and_fuse(x, w, beta, fusion_manner):
    """Channel attention + fusion for one block.

    x: (bt, C, S) in the input dtype.  w: (bt, C) float32 softmax weights.
    beta: float32 scalar (used only for fusion_manner='add').

    The channel contraction is a VPU broadcast-multiply + sublane reduce with
    f32 accumulation (MXU offers no win for an M=1 contraction in an HBM-bound
    kernel).  The final elementwise fusion runs in the input dtype so no
    full-block f32 copy of the output is materialized.
    """
    att = jnp.sum(w[:, :, None] * x.astype(jnp.float32), axis=1, keepdims=True)  # (bt,1,S)
    if fusion_manner == 'add':
        return x + (beta * att).astype(x.dtype)
    return x * jax.nn.sigmoid(att).astype(x.dtype)


# ---------------------------------------------------------------------------
# Fused single-pass kernel (default path)
# ---------------------------------------------------------------------------
def _gca_fused_kernel(beta_ref, x_ref, o_ref, *, fusion_manner, true_s):
    x = x_ref[...]                                                      # (bt, C, S)
    # context = AdaptiveAvgPool2d(1): per-channel spatial mean, f32 accumulation.
    ctx = jnp.sum(x.astype(jnp.float32), axis=-1) * (1.0 / float(true_s))   # (bt, C)
    # attention = softmax over the channel dim (f32, max-subtracted).
    m = jnp.max(ctx, axis=-1, keepdims=True)
    e = jnp.exp(ctx - m)
    w = e * pl.reciprocal(jnp.sum(e, axis=-1, keepdims=True), approx=False)  # (bt, C)
    o_ref[...] = _attend_and_fuse(x, w, beta_ref[0], fusion_manner).astype(o_ref.dtype)


# ---------------------------------------------------------------------------
# Two-pass S-tiled fallback kernels
# ---------------------------------------------------------------------------
def _gca_ctx_kernel(x_ref, ctx_ref, *, true_s, s_tile, mask_tail):
    """Pass 1: accumulate per-(b, c) spatial sums across S tiles, emit means."""
    s_i = pl.program_id(1)

    @pl.when(s_i == 0)
    def _init():
        ctx_ref[...] = jnp.zeros_like(ctx_ref)

    xf = x_ref[...].astype(jnp.float32)                       # (1, C, s_tile)
    if mask_tail:
        # The final S tile extends past the array; mask the ragged lanes so
        # unspecified DMA padding never reaches the reduction.
        pos = jax.lax.broadcasted_iota(jnp.int32, xf.shape, 2) + s_i * s_tile
        xf = jnp.where(pos < true_s, xf, 0.0)
    ctx_ref[...] += jnp.sum(xf, axis=-1)[:, None, :]          # (1, 1, C)

    @pl.when(s_i == pl.num_programs(1) - 1)
    def _finalize():
        ctx_ref[...] = ctx_ref[...] * (1.0 / float(true_s))


def _gca_fuse_kernel(beta_ref, w_ref, x_ref, o_ref, *, fusion_manner):
    """Pass 2: re-sweep S tiles applying the channel attention + fusion."""
    x = x_ref[...]                     # (1, C, s_tile)
    w = w_ref[...][:, 0, :]            # (1, C) float32 softmax weights
    o_ref[...] = _attend_and_fuse(x, w, beta_ref[0], fusion_manner).astype(o_ref.dtype)


# ---------------------------------------------------------------------------
# Wrapper-side tiling decisions
# ---------------------------------------------------------------------------
def _divisors(n):
    return [d for d in range(1, n + 1) if n % d == 0]


def _largest_divisor_at_most(n, cap):
    cap = max(1, cap)
    return max(d for d in _divisors(n) if d <= cap)


def _tensorcores_per_device():
    """Best-effort TensorCores behind one JAX device (v4/v5p megacore, v7x: 2)."""
    try:
        kind = jax.local_devices()[0].device_kind.lower()
    except Exception:
        return 1
    return 2 if any(tag in kind for tag in ("v4", "v5p", "v7", "tpu7")) else 1


def _select_batch_tile(B, per_batch_bytes, num_cores):
    # Largest divisor of B whose (bt, C, S) block stays under the target size;
    # only divisors are considered so the wrapper never pads / slices in HBM.
    bt = _largest_divisor_at_most(B, _TARGET_BLOCK_BYTES // max(1, per_batch_bytes))
    if num_cores > 1 and B > 1:
        # Multi-TensorCore devices: prefer >=2 grid steps per core so every
        # core keeps a pipelined DMA stream, but never shrink the block below
        # ~1 MiB (unless the whole tensor is tiny and per-step overhead is
        # negligible either way).
        for want_steps in (2 * num_cores, num_cores):
            cands = [d for d in _divisors(B)
                     if B // d >= want_steps
                     and (d * per_batch_bytes >= _MIN_BLOCK_BYTES
                          or B * per_batch_bytes <= want_steps * _MIN_BLOCK_BYTES)]
            if cands:
                bt = min(bt, max(cands))
                break
    return bt


def _single_pass_footprint_bytes(C, S, itemsize, bt):
    block = bt * C * S * itemsize
    block_f32 = bt * C * S * 4
    # Double-buffered input + output blocks plus in-kernel f32 temporaries
    # (the x.astype(f32) feeding the reductions and the w*x product).
    return 4 * block + 2 * block_f32


# ---------------------------------------------------------------------------
# pallas_call wrappers
# ---------------------------------------------------------------------------
def _gca_forward_fused(xr, beta, fusion_manner, B, C, S, itemsize):
    per_batch_bytes = C * S * itemsize
    bt = _select_batch_tile(B, per_batch_bytes, _tensorcores_per_device())
    kernel = functools.partial(_gca_fused_kernel, fusion_manner=fusion_manner, true_s=S)
    return pl.pallas_call(
        kernel,
        out_shape=jax.ShapeDtypeStruct((B, C, S), xr.dtype),
        grid=(B // bt,),
        in_specs=[
            pl.BlockSpec(memory_space=pltpu.MemorySpace.SMEM),   # beta (scalar)
            pl.BlockSpec((bt, C, S), lambda b: (b, 0, 0)),       # x batch tile
        ],
        out_specs=pl.BlockSpec((bt, C, S), lambda b: (b, 0, 0)),
        compiler_params=pltpu.CompilerParams(
            dimension_semantics=("parallel",),
            vmem_limit_bytes=_VMEM_LIMIT_BYTES),
    )(beta, xr)


def _gca_forward_tiled(xr, beta, fusion_manner, B, C, S, itemsize, s_tile=None):
    if s_tile is None:
        s_tile = max(_LANE,
                     (_S_TILE_TARGET_BYTES // max(1, C * itemsize)) // _LANE * _LANE)
        s_tile = min(s_tile, _LANE * pl.cdiv(S, _LANE))
    num_s = pl.cdiv(S, s_tile)
    mask_tail = (S % s_tile) != 0

    # Pass 1: per-(b, c) spatial sums accumulated across S tiles into a
    # resident (1, 1, C) output block (reduction axis last, "arbitrary").
    ctx = pl.pallas_call(
        functools.partial(_gca_ctx_kernel, true_s=S, s_tile=s_tile, mask_tail=mask_tail),
        out_shape=jax.ShapeDtypeStruct((B, 1, C), jnp.float32),
        grid=(B, num_s),
        in_specs=[pl.BlockSpec((1, C, s_tile), lambda b, s: (b, 0, s))],
        out_specs=pl.BlockSpec((1, 1, C), lambda b, s: (b, 0, 0)),
        compiler_params=pltpu.CompilerParams(
            dimension_semantics=("parallel", "arbitrary"),
            vmem_limit_bytes=_VMEM_LIMIT_BYTES),
    )(xr)

    # Channel softmax on (B, 1, C) scalars: plain JAX, negligible next to the
    # two streaming passes over x.
    w = jax.nn.softmax(ctx, axis=-1)

    # Pass 2: re-sweep S tiles, apply attention + fusion.
    return pl.pallas_call(
        functools.partial(_gca_fuse_kernel, fusion_manner=fusion_manner),
        out_shape=jax.ShapeDtypeStruct((B, C, S), xr.dtype),
        grid=(B, num_s),
        in_specs=[
            pl.BlockSpec(memory_space=pltpu.MemorySpace.SMEM),     # beta
            pl.BlockSpec((1, 1, C), lambda b, s: (b, 0, 0)),       # softmax weights
            pl.BlockSpec((1, C, s_tile), lambda b, s: (b, 0, s)),  # x S tile
        ],
        out_specs=pl.BlockSpec((1, C, s_tile), lambda b, s: (b, 0, s)),
        compiler_params=pltpu.CompilerParams(
            dimension_semantics=("parallel", "parallel"),
            vmem_limit_bytes=_VMEM_LIMIT_BYTES),
    )(beta, w, xr)


def gca_forward(x, beta, fusion_manner='add', *, force_tiled=False, s_tile=None):
    """GCA_Module.forward.  x: (B, C, H, W); beta: shape-(1,) parameter."""
    assert fusion_manner in ('add', 'mul')
    B, C, H, W = x.shape
    S = H * W
    itemsize = jnp.dtype(x.dtype).itemsize

    xr = x.reshape(B, C, S)        # trailing-dim merge: metadata only, no HBM copy
    beta = jnp.asarray(beta, dtype=jnp.float32).reshape((1,))

    if force_tiled or _single_pass_footprint_bytes(C, S, itemsize, 1) > _SINGLE_PASS_VMEM_BUDGET:
        out = _gca_forward_tiled(xr, beta, fusion_manner, B, C, S, itemsize, s_tile=s_tile)
    else:
        out = _gca_forward_fused(xr, beta, fusion_manner, B, C, S, itemsize)
    return out.reshape(B, C, H, W)


# ---------------------------------------------------------------------------
# Pure-JAX reference (mirrors the PyTorch forward exactly)
# ---------------------------------------------------------------------------
def gca_reference(x, beta, fusion_manner='add'):
    B, C, H, W = x.shape
    context = jnp.mean(x, axis=(2, 3))                          # (B, C) == avg_pool
    attention = jax.nn.softmax(context[:, None, :], axis=-1)    # (B, 1, C)
    proj_value = x.reshape(B, C, H * W)                          # (B, C, HW)
    attention_term = jnp.einsum('bic,bcs->bis', attention, proj_value)
    attention_term = attention_term.reshape(B, 1, H, W)
    if fusion_manner == 'add':
        return x + beta[0] * attention_term
    return x * jax.nn.sigmoid(attention_term)


if __name__ == "__main__":
    root = jax.random.PRNGKey(0)
    k1, k2, k3, k4 = jax.random.split(root, 4)

    def check(name, x, beta, fusion, atol, **kw):
        out = jax.block_until_ready(gca_forward(x, beta, fusion_manner=fusion, **kw))
        ref = gca_reference(x.astype(jnp.float32), beta, fusion_manner=fusion)
        got = np.asarray(out.astype(jnp.float32))
        want = np.asarray(ref)
        if not np.allclose(got, want, atol=atol, rtol=atol):
            raise AssertionError(f"mismatch for case '{name}'")

    beta0 = jnp.zeros((1,), dtype=jnp.float32)
    beta5 = jnp.full((1,), 0.5, dtype=jnp.float32)

    # Fused single-pass path, f32, lane-aligned spatial size.
    x1 = jax.random.normal(k1, (2, 4, 16, 16), dtype=jnp.float32)
    check("add beta=0", x1, beta0, "add", 1e-5)
    check("add beta=0.5", x1, beta5, "add", 1e-5)
    check("mul", x1, beta0, "mul", 1e-5)

    # Odd batch + spatial size that is not a multiple of 128 (no padding path).
    x2 = jax.random.normal(k2, (3, 4, 10, 10), dtype=jnp.float32)
    check("ragged add", x2, beta5, "add", 1e-5)
    check("ragged mul", x2, beta0, "mul", 1e-5)

    # bf16 input: f32 reductions in-kernel, fusion in bf16.
    x3 = jax.random.normal(k3, (2, 4, 16, 16), dtype=jnp.bfloat16)
    check("bf16 add", x3, beta5, "add", 5e-2)

    # Two-pass S-tiled fallback, forced at a small shape with a ragged S tail
    # (S = 144, s_tile = 128 -> 2 tiles, masked remainder).
    x4 = jax.random.normal(k4, (2, 4, 12, 12), dtype=jnp.float32)
    check("tiled add", x4, beta5, "add", 1e-5, force_tiled=True, s_tile=128)
    check("tiled mul", x4, beta0, "mul", 1e-5, force_tiled=True, s_tile=128)

    print("KERNEL_OK")
</pallas_src>

<mosaic_0001>
module attributes {stable_mosaic.version = 11 : i64} {
  func.func @_gca_fused_kernel(%arg0: i32, %arg1: memref<1xf32, #tpu.memory_space<smem>>, %arg2: memref<2x4x256xf32, #tpu.memory_space<vmem>>, %arg3: memref<2x4x256xf32, #tpu.memory_space<vmem>>) attributes {dimension_semantics = [#tpu.dimension_semantics<parallel>], iteration_bounds = array<i64: 1>, scalar_prefetch = 0 : i64, scratch_operands = 0 : i64, tpu.core_type = #tpu.core_type<tc>, window_params = [{transform_indices = @transform_0, window_bounds = array<i64: 1>}, {transform_indices = @transform_1, window_bounds = array<i64: 2, 4, 256>}, {transform_indices = @transform_2, window_bounds = array<i64: 2, 4, 256>}]} {
    %c0 = arith.constant 0 : index
    %c0_0 = arith.constant 0 : index
    %c0_1 = arith.constant 0 : index
    %0 = vector.load %arg2[%c0, %c0_0, %c0_1] : memref<2x4x256xf32, #tpu.memory_space<vmem>>, vector<2x4x256xf32>
    %cst = arith.constant dense<0.000000e+00> : vector<2x4xf32>
    %1 = vector.multi_reduction <add>, %0, %cst [2] : vector<2x4x256xf32> to vector<2x4xf32>
    %cst_2 = arith.constant 3.906250e-03 : f32
    %2 = vector.broadcast %cst_2 : f32 to vector<2x4xf32>
    %3 = arith.mulf %1, %2 : vector<2x4xf32>
    %cst_3 = arith.constant dense<0xFF800000> : vector<2xf32>
    %4 = vector.multi_reduction <maximumf>, %3, %cst_3 [1] : vector<2x4xf32> to vector<2xf32>
    %5 = vector.shape_cast %4 : vector<2xf32> to vector<2x1xf32>
    %6 = vector.broadcast %5 : vector<2x1xf32> to vector<2x4xf32>
    %7 = arith.subf %3, %6 : vector<2x4xf32>
    %8 = math.exp %7 : vector<2x4xf32>
    %cst_4 = arith.constant dense<0.000000e+00> : vector<2xf32>
    %9 = vector.multi_reduction <add>, %8, %cst_4 [1] : vector<2x4xf32> to vector<2xf32>
    %10 = vector.shape_cast %9 : vector<2xf32> to vector<2x1xf32>
    %11 = tpu.reciprocal %10 : vector<2x1xf32> -> vector<2x1xf32>
    %12 = vector.broadcast %11 : vector<2x1xf32> to vector<2x4xf32>
    %13 = arith.mulf %8, %12 : vector<2x4xf32>
    %c0_5 = arith.constant 0 : index
    %14 = memref.load %arg1[%c0_5] : memref<1xf32, #tpu.memory_space<smem>>
    %15 = vector.shape_cast %13 : vector<2x4xf32> to vector<2x4x1xf32>
    %16 = vector.broadcast %15 : vector<2x4x1xf32> to vector<2x4x256xf32>
    %17 = arith.mulf %16, %0 : vector<2x4x256xf32>
    %cst_6 = arith.constant dense<0.000000e+00> : vector<2x256xf32>
    %18 = vector.multi_reduction <add>, %17, %cst_6 [1] : vector<2x4x256xf32> to vector<2x256xf32>
    %19 = vector.shape_cast %18 : vector<2x256xf32> to vector<2x1x256xf32>
    %20 = vector.broadcast %14 : f32 to vector<2x1x256xf32>
    %21 = arith.mulf %20, %19 : vector<2x1x256xf32>
    %22 = vector.broadcast %21 : vector<2x1x256xf32> to vector<2x4x256xf32>
    %23 = arith.addf %0, %22 : vector<2x4x256xf32>
    %c0_7 = arith.constant 0 : index
    %c0_8 = arith.constant 0 : index
    %c0_9 = arith.constant 0 : index
    %24 = vector.load %arg3[%c0_7, %c0_8, %c0_9] : memref<2x4x256xf32, #tpu.memory_space<vmem>>, vector<2x4x256xf32>
    tpu.vector_store %arg3[%c0_7, %c0_8, %c0_9], %23 {strides = array<i32>} : memref<2x4x256xf32, #tpu.memory_space<vmem>>, vector<2x4x256xf32>,
    return
  }
  func.func @transform_0(%arg0: i32) -> i32 {
    %c0_i32 = arith.constant 0 : i32
    %c0_i32_0 = arith.constant 0 : i32
    return %c0_i32 : i32
  }
  func.func @transform_1(%arg0: i32) -> (i32, i32, i32) {
    %c0_i32 = arith.constant 0 : i32
    %c0_i32_0 = arith.constant 0 : i32
    %c0_i32_1 = arith.constant 0 : i32
    return %arg0, %c0_i32, %c0_i32_0 : i32, i32, i32
  }
  func.func @transform_2(%arg0: i32) -> (i32, i32, i32) {
    %c0_i32 = arith.constant 0 : i32
    %c0_i32_0 = arith.constant 0 : i32
    %c0_i32_1 = arith.constant 0 : i32
    return %arg0, %c0_i32, %c0_i32_0 : i32, i32, i32
  }
}

</mosaic_0001>

<llo_original>
// kernel: tpu_custom_call.1
$region0: #{tpu_custom_call.1}
  #allocation0 [shape = 'u32[]', space=smem, size = 0x4, offset = 0x4, fixed_abs, tag = 'smem constant byte address 0x4 - core index']
  #allocation1 [shape = 'u32[144,128]{1,0:T(1,128)}', space=vmem, size = 0x12000, scoped, tag = 'internal scratch']
  #allocation2 [shape = 'f32[1]{0:T(128)S(6)}', space=smem, size = 0x200, scoped, tag = 'scoped memory for tpu_custom_call.1']
  %s0 = inlined_call_operand.<no memory space> [shape: f32[1], index: 0, kind: input, shape index: {}]
  %s1 = inlined_call_operand.hbm [shape: f32[2,4,256], index: 1, kind: input, shape index: {}]
  %s2 = inlined_call_operand.hbm [shape: f32[2,4,256], index: 2, kind: output, shape index: {}]
  %s3 = sld [smem:[#allocation0]]
  $region22: #{tpu_custom_call.1} parent=0
    _
  %s5 = ssub.s32 1, %s3
  %s6 = scalar_select 0, %s5, %s3
  %7 = sst [smem:[#allocation2]] %s0
  $region1: #{tpu_custom_call.1} parent=0
    #allocation3 [shape = 'u8[8192]{0}', space=vmem, size = 0x2000, scoped, tag = 'input window, operand 1, single buffered']
    #allocation4 [shape = 's32[1]{0}', space=sflag, size = 0x4, scoped, tag = 'scoped memory for tpu_custom_call.1']
    #allocation5 [shape = 's32[1]{0}', space=sflag, size = 0x4, scoped, tag = 'scoped memory for tpu_custom_call.1']
    #allocation6 [shape = 'u8[8192]{0}', space=vmem, size = 0x2000, scoped, tag = 'output window, operand 0, single buffered']
    %8 = vsyncpa [#allocation4], 0
    %9 = vsyncpa [#allocation5], 0
    // Predicated region
    $region2: #{tpu_custom_call.1} parent=1 // pred_check
      _
    $region3: #{tpu_custom_call.1} parent=1 // pred_check_branch
      %11 = sbr.rel (0) target = $region5
    $region4: #{tpu_custom_call.1} parent=1 // pred_region
      _
    $region5: #{tpu_custom_call.1} parent=1 // pred_fallthru
      _
    // Predicated region
    $region6: #{tpu_custom_call.1} parent=1 // pred_check
      _
    $region7: #{tpu_custom_call.1} parent=1 // pred_check_branch
      %13 = sbr.rel (0) target = $region9
    $region8: #{tpu_custom_call.1} parent=1 // pred_region
      %s15 = ssub.s32 256, 256
      %16 = vsyncadd [#allocation4], %s15
      %s17 = sshll.u32 [#allocation3], 4
      %s18 = int_to_ptr.vmem [resolvable:$true] %s17
      %23 = dma.hbm_to_vmem [thread:$0]  %s1, 256, %s18, [#allocation4], 128, 128, 8
    $region9: #{tpu_custom_call.1} parent=1 // pred_fallthru
      _
    // Predicated region
    $region10: #{tpu_custom_call.1} parent=1 // pred_check
      _
    $region11: #{tpu_custom_call.1} parent=1 // pred_check_branch
      %25 = sbr.rel (0) target = $region13
    $region12: #{tpu_custom_call.1} parent=1 // pred_region
      %26 = dma.done [#allocation4], 256
    $region13: #{tpu_custom_call.1} parent=1 // pred_fallthru
      _
    %v27 = vld [vmem:[#allocation3] sm:$0xff]
    %v28 = vld [vmem:[#allocation3 + $0x8] sm:$0xff]
    %v31 = vcombine.high %v27, %v27
    %v32 = vcombine.high %v28, %v28
    %vm35 = vcmask 1043456
    %v36 = vsel %vm35, %v27, 0.0
    %v37 = vsel %vm35, %v31, 0.0
    %v38 = vadd.f32 %v36, %v37
    %39 = vadd.xlane.f32.xlu0 %v38
    %v40 = vpop.xlane.xlu0 %39
    %v41 = vsel %vm35, %v28, 0.0
    %v42 = vsel %vm35, %v32, 0.0
    %v43 = vadd.f32 %v41, %v42
    %44 = vadd.xlane.f32.xlu0 %v43
    %v45 = vpop.xlane.xlu0 %44
    %v46 = vmul.f32 %v40, 0.00390625
    %v47 = vmul.f32 %v45, 0.00390625
    %v50 = vlaneseq
    %v51 = vand.u32 %v50, 127
    %v52 = vlaneseq
    %v53 = vshrl.u32 %v52, 7
    %v54 = vsub.s32 %v51, %v53
    %v55 = vrot.slane %v46, %v54
    %v56 = vlaneseq
    %v57 = vshrl.u32 %v56, 7
    %v58 = vsub.s32 %v51, %v57
    %v59 = vrot.slane %v47, %v58
    %vm60 = vcmask 1041409
    %v61 = vsel %vm60, %v59, %v55
    %vm63 = vcmask 25600
    %v64 = vsel %vm63, %v61, -inf
    %65 = vmax.xlane.f32.xlu0 %v64
    %v66 = vpop.xlane.xlu0 %65
    %v68 = vlaneseq
    %v69 = vshrl.u32 %v68, 7
    %v70 = vsub.s32 0, %v69
    %v71 = vrot.slane %v66, %v70
    %v72 = vlaneseq
    %v73 = vshrl.u32 %v72, 7
    %v74 = vsub.s32 1, %v73
    %v75 = vrot.slane %v66, %v74
    %v78 = vsub.f32 %v46, %v71
    %v79 = vsub.f32 %v47, %v75
    %v80 = vmul.f32 %v78, 1.442695
    %v81 = vpow.pop %v80
    %v82 = vmul.f32 %v79, 1.442695
    %v83 = vpow.pop %v82
    %86 = vset.pattern.permute.xlu0 0
    %87 = vperm.xlu0 %86, %v81
    %v88 = vpop.permute.xlu0 %87
    %89 = vset.pattern.permute.xlu0 0
    %90 = vperm.xlu0 %89, %v83
    %v91 = vpop.permute.xlu0 %90
    %v92 = vlaneseq
    %v93 = vshrl.u32 %v92, 7
    %v94 = vsub.s32 %v51, %v93
    %v95 = vrot.slane %v88, %v94
    %v96 = vlaneseq
    %v97 = vshrl.u32 %v96, 7
    %v98 = vsub.s32 %v51, %v97
    %v99 = vrot.slane %v91, %v98
    %v100 = vsel %vm60, %v99, %v95
    %v102 = vsel %vm63, %v100, 0.0
    %103 = vadd.xlane.f32.xlu0 %v102
    %v104 = vpop.xlane.xlu0 %103
    %v105 = vrcp.pop %v104
    %v107 = vlaneseq
    %v108 = vshrl.u32 %v107, 7
    %v109 = vsub.s32 0, %v108
    %v110 = vrot.slane %v105, %v109
    %v111 = vlaneseq
    %v112 = vshrl.u32 %v111, 7
    %v113 = vsub.s32 1, %v112
    %v114 = vrot.slane %v105, %v113
    %v117 = vmul.f32 %v81, %v110
    %v118 = vmul.f32 %v83, %v114
    %s119 = sld [smem:[#allocation2]]
    %121 = vset.pattern.permute.xlu0 0
    %122 = vperm.xlu0 %121, %v117
    %v123 = vpop.permute.xlu0 %122
    %126 = vset.pattern.permute.xlu0 0
    %127 = vperm.xlu0 %126, %v118
    %v128 = vpop.permute.xlu0 %127
    %v130 = vmul.f32 %v123, %v27
    %v131 = vmul.f32 %v123, %v31
    %v132 = vmul.f32 %v128, %v28
    %v133 = vmul.f32 %v128, %v32
    %v134 = vsel %vm35, %v130, 0.0
    %v135 = vrot.slane %v134, 4
    %v136 = vadd.f32 %v134, %v135
    %v137 = vrot.slane %v136, 2
    %v138 = vadd.f32 %v136, %v137
    %v139 = vrot.slane %v138, 1
    %v140 = vadd.f32 %v138, %v139
    %v141 = vsel %vm35, %v131, 0.0
    %v142 = vrot.slane %v141, 4
    %v143 = vadd.f32 %v141, %v142
    %v144 = vrot.slane %v143, 2
    %v145 = vadd.f32 %v143, %v144
    %v146 = vrot.slane %v145, 1
    %v147 = vadd.f32 %v145, %v146
    %v148 = vsel %vm35, %v132, 0.0
    %v149 = vrot.slane %v148, 4
    %v150 = vadd.f32 %v148, %v149
    %v151 = vrot.slane %v150, 2
    %v152 = vadd.f32 %v150, %v151
    %v153 = vrot.slane %v152, 1
    %v154 = vadd.f32 %v152, %v153
    %v155 = vsel %vm35, %v133, 0.0
    %v156 = vrot.slane %v155, 4
    %v157 = vadd.f32 %v155, %v156
    %v158 = vrot.slane %v157, 2
    %v159 = vadd.f32 %v157, %v158
    %v160 = vrot.slane %v159, 1
    %v161 = vadd.f32 %v159, %v160
    %v162 = vstv %s119
    %v163 = vmul.f32 %v162, %v140
    %v164 = vmul.f32 %v162, %v147
    %v165 = vmul.f32 %v162, %v154
    %v166 = vmul.f32 %v162, %v161
    %v171 = vcombine.low %v163, %v164
    %v172 = vcombine.low %v165, %v166
    %v175 = vadd.f32 %v27, %v171
    %v176 = vadd.f32 %v28, %v172
    %177 = vst [vmem:[#allocation6] sm:$0xff] %v175
    %178 = vst [vmem:[#allocation6 + $0x8] sm:$0xff] %v176
    // Predicated region
    $region14: #{tpu_custom_call.1} parent=1 // pred_check
      _
    $region15: #{tpu_custom_call.1} parent=1 // pred_check_branch
      %180 = sbr.rel (0) target = $region17
    $region16: #{tpu_custom_call.1} parent=1 // pred_region
      %s182 = ssub.s32 256, 256
      %183 = vsyncadd [#allocation5], %s182
      %s184 = sshll.u32 [#allocation6], 4
      %s185 = int_to_ptr.vmem [resolvable:$true] %s184
      %190 = dma.vmem_to_hbm [thread:$0]  %s185, 256, %s2, [#allocation5], 128, 128, 8
    $region17: #{tpu_custom_call.1} parent=1 // pred_fallthru
      _
    // Predicated region
    $region18: #{tpu_custom_call.1} parent=1 // pred_check
      _
    $region19: #{tpu_custom_call.1} parent=1 // pred_check_branch
      %192 = sbr.rel (0) target = $region21
    $region20: #{tpu_custom_call.1} parent=1 // pred_region
      %193 = dma.done [#allocation5], 256
    $region21: #{tpu_custom_call.1} parent=1 // pred_fallthru
      _
    %194 = vsyncpa [#allocation4], 1
    %195 = vsyncpa [#allocation5], 1

</llo_original>
